<compile_context>
chip_gen: v7x
topology: tpu7x:2x2x1
jax: 0.10.0
libtpu: 0.0.40
codegen_flags: <defaults>
</compile_context>

<pallas_src>
import functools
import math

import jax
import jax.numpy as jnp
from jax.experimental import pallas as pl
from jax.experimental.pallas import tpu as pltpu


def _round_up(x, m):
    return ((x + m - 1) // m) * m


def actor_critic_kernel(
    scalars_ref,                      # SMEM (2,) : [neg_inv_2var, logp_const]
    state_ref, action_ref,            # VMEM [TB, S], [TB, A+1] (last lane of action is padding)
    w1_ref, b1_ref,                   # [S, 2H], [1, 2H]      (actor|critic layer-1 concatenated)
    w2_ref, b2_ref,                   # [2H, 2H], [1, 2H]     (block-diagonal layer-2)
    w3_ref, b3_ref,                   # [2H, A+1], [1, A+1]   (block-diagonal layer-3)
    out_ref,                          # [TB, A+1] : cols 0..A-1 = logp, col A = value
    *, action_dim,
):
    x = state_ref[...]                # [TB, S]
    a_pad = action_ref[...]           # [TB, A+1]
    neg_inv_2var = scalars_ref[0]
    logp_const = scalars_ref[1]

    # Fused actor+critic MLP (MXU matmuls accumulate in f32).
    h = jnp.tanh(jnp.dot(x, w1_ref[...],
                         preferred_element_type=jnp.float32) + b1_ref[...])     # [TB, 2H]
    h = jnp.tanh(jnp.dot(h, w2_ref[...],
                         preferred_element_type=jnp.float32) + b2_ref[...])     # [TB, 2H]
    y = jnp.dot(h, w3_ref[...],
                preferred_element_type=jnp.float32) + b3_ref[...]               # [TB, A+1]

    # Actor columns get tanh -> action_mean; the value column keeps the raw linear output.
    mean_all = jnp.tanh(y)                                   # tanh of value column is discarded
    diff = a_pad - mean_all
    logp_all = diff * diff * neg_inv_2var + logp_const       # Normal log_prob, fully vectorized

    col = jax.lax.broadcasted_iota(jnp.int32, y.shape, 1)
    out_ref[...] = jnp.where(col < action_dim, logp_all, y)  # one lane-contiguous store stream


def pack_params(params):
    """Fuse actor/critic weights once (outside the kernel).
    Input: (aw1, ab1, aw2, ab2, aw3, ab3, cw1, cb1, cw2, cb2, cw3, cb3),
    weights in [in, out] layout, biases [1, out]."""
    (aw1, ab1, aw2, ab2, aw3, ab3, cw1, cb1, cw2, cb2, cw3, cb3) = params

    def block_diag(a, b):
        m1, n1 = a.shape
        m2, n2 = b.shape
        out = jnp.zeros((m1 + m2, n1 + n2), a.dtype)
        out = out.at[:m1, :n1].set(a)
        out = out.at[m1:, n1:].set(b)
        return out

    w1 = jnp.concatenate([aw1, cw1], axis=1)       # [S, 2H]
    b1 = jnp.concatenate([ab1, cb1], axis=1)       # [1, 2H]
    w2 = block_diag(aw2, cw2)                      # [2H, 2H]
    b2 = jnp.concatenate([ab2, cb2], axis=1)       # [1, 2H]
    w3 = block_diag(aw3, cw3)                      # [2H, A+1]
    b3 = jnp.concatenate([ab3, cb3], axis=1)       # [1, A+1]
    return (w1, b1, w2, b2, w3, b3)


def actor_critic_evaluate(state, action, packed_params, std, *, block_b=1024):
    """Returns (action_logprobs [B,A], state_value (torch.squeeze), dist_entropy [B,A])."""
    B, S = state.shape
    A = action.shape[1]
    w1, b1, w2, b2, w3, b3 = packed_params
    H2 = w1.shape[1]                               # fused hidden width (2H)

    std = jnp.asarray(std, jnp.float32)
    half_log_2pi = jnp.float32(0.5 * math.log(2.0 * math.pi))
    neg_inv_2var = -0.5 / (std * std)
    logp_const = -(jnp.log(std) + half_log_2pi)
    scalars = jnp.stack([neg_inv_2var, logp_const]).astype(jnp.float32)   # -> SMEM

    # Batch tile: multiple of 8 (sublane), at most `block_b`; pad batch so the grid divides.
    tb = min(block_b, _round_up(B, 8))
    b_pad = _round_up(B, tb)

    state_f = state.astype(jnp.float32)
    action_f = action.astype(jnp.float32)
    if b_pad != B:
        state_p = jnp.pad(state_f, ((0, b_pad - B), (0, 0)))
    else:
        state_p = state_f
    # One extra (padding) lane on action so it lines up with the packed [.., A+1] output.
    action_p = jnp.pad(action_f, ((0, b_pad - B), (0, 1)))

    kernel = functools.partial(actor_critic_kernel, action_dim=A)

    out = pl.pallas_call(
        kernel,
        out_shape=jax.ShapeDtypeStruct((b_pad, A + 1), jnp.float32),
        grid=(b_pad // tb,),
        in_specs=[
            pl.BlockSpec(memory_space=pltpu.MemorySpace.SMEM),      # scalar constants
            pl.BlockSpec((tb, S), lambda i: (i, 0)),                # state (batch tiled)
            pl.BlockSpec((tb, A + 1), lambda i: (i, 0)),            # action (batch tiled)
            pl.BlockSpec((S, H2), lambda i: (0, 0)),                # weights: VMEM-resident
            pl.BlockSpec((1, H2), lambda i: (0, 0)),
            pl.BlockSpec((H2, H2), lambda i: (0, 0)),
            pl.BlockSpec((1, H2), lambda i: (0, 0)),
            pl.BlockSpec((H2, A + 1), lambda i: (0, 0)),
            pl.BlockSpec((1, A + 1), lambda i: (0, 0)),
        ],
        out_specs=pl.BlockSpec((tb, A + 1), lambda i: (i, 0)),
        compiler_params=pltpu.CompilerParams(
            dimension_semantics=("parallel",),       # shard batch tiles across TCs (v7x)
            vmem_limit_bytes=64 << 20,
        ),
    )(scalars, state_p, action_p, w1, b1, w2, b2, w3, b3)

    logp = out[:B, :A]
    value = jnp.squeeze(out[:B, A:A + 1])            # torch.squeeze semantics (all size-1 dims)
    entropy = jnp.full((B, A), 0.5 + half_log_2pi + jnp.log(std), jnp.float32)
    return logp, value, entropy


# ----------------------------- parameter init & reference -----------------------------

def init_linear(key, fan_in, fan_out):
    """PyTorch-style uniform(-1/sqrt(fan_in), 1/sqrt(fan_in)) init; W is [in, out], b is [1, out]."""
    kw, kb = jax.random.split(key)
    bound = 1.0 / math.sqrt(fan_in)
    w = jax.random.uniform(kw, (fan_in, fan_out), jnp.float32, -bound, bound)
    b = jax.random.uniform(kb, (1, fan_out), jnp.float32, -bound, bound)
    return w, b


def make_params(key, state_dim, hidden, action_dim):
    keys = jax.random.split(key, 6)
    aw1, ab1 = init_linear(keys[0], state_dim, hidden)
    aw2, ab2 = init_linear(keys[1], hidden, hidden)
    aw3, ab3 = init_linear(keys[2], hidden, action_dim)
    cw1, cb1 = init_linear(keys[3], state_dim, hidden)
    cw2, cb2 = init_linear(keys[4], hidden, hidden)
    cw3, cb3 = init_linear(keys[5], hidden, 1)
    return (aw1, ab1, aw2, ab2, aw3, ab3, cw1, cb1, cw2, cb2, cw3, cb3)


def reference_evaluate(state, action, params, std):
    (aw1, ab1, aw2, ab2, aw3, ab3, cw1, cb1, cw2, cb2, cw3, cb3) = params
    h = jnp.tanh(state @ aw1 + ab1)
    h = jnp.tanh(h @ aw2 + ab2)
    mean = jnp.tanh(h @ aw3 + ab3)
    c = jnp.tanh(state @ cw1 + cb1)
    c = jnp.tanh(c @ cw2 + cb2)
    value = c @ cw3 + cb3
    log_std = jnp.log(std)
    half_log_2pi = 0.5 * math.log(2.0 * math.pi)
    logp = -((action - mean) ** 2) / (2.0 * std * std) - log_std - half_log_2pi
    ent = jnp.zeros_like(mean) + (0.5 + half_log_2pi + log_std)
    return logp, jnp.squeeze(value), ent


if __name__ == "__main__":
    # Small shapes consistent with the module: N (hidden) = 32, state_dim = 8,
    # action_dim = 4 (matches the hard-coded torch.ones(4)), batch = 8.
    B, STATE_DIM, HIDDEN, ACTION_DIM = 8, 8, 32, 4
    ACTION_STD = 0.5

    root = jax.random.PRNGKey(0)
    k_params, k_state, k_action = jax.random.split(root, 3)

    params = make_params(k_params, STATE_DIM, HIDDEN, ACTION_DIM)
    packed = pack_params(params)     # one-time actor/critic fusion (outside the kernel)

    state = jax.random.normal(k_state, (B, STATE_DIM), jnp.float32)
    action = jax.random.normal(k_action, (B, ACTION_DIM), jnp.float32)

    logp, value, entropy = actor_critic_evaluate(state, action, packed, ACTION_STD)
    jax.block_until_ready((logp, value, entropy))

    # Correctness check against a pure-JAX reference of ActorCritic.evaluate().
    r_logp, r_value, r_entropy = reference_evaluate(state, action, params, jnp.float32(ACTION_STD))
    assert jnp.allclose(logp, r_logp, atol=1e-5, rtol=1e-5)
    assert jnp.allclose(value, r_value, atol=1e-5, rtol=1e-5)
    assert jnp.allclose(entropy, r_entropy, atol=1e-5, rtol=1e-5)

    # TODO(synk): act() (Normal sampling + Memory side effects) is host/RNG bookkeeping, not kernelized.
    print("KERNEL_OK")
</pallas_src>

<mosaic_0001>
module attributes {stable_mosaic.version = 11 : i64} {
  func.func @actor_critic_kernel(%arg0: i32, %arg1: memref<2xf32, #tpu.memory_space<smem>>, %arg2: memref<8x8xf32, #tpu.memory_space<vmem>>, %arg3: memref<8x5xf32, #tpu.memory_space<vmem>>, %arg4: memref<8x64xf32, #tpu.memory_space<vmem>>, %arg5: memref<1x64xf32, #tpu.memory_space<vmem>>, %arg6: memref<64x64xf32, #tpu.memory_space<vmem>>, %arg7: memref<1x64xf32, #tpu.memory_space<vmem>>, %arg8: memref<64x5xf32, #tpu.memory_space<vmem>>, %arg9: memref<1x5xf32, #tpu.memory_space<vmem>>, %arg10: memref<8x5xf32, #tpu.memory_space<vmem>>) attributes {dimension_semantics = [#tpu.dimension_semantics<parallel>], iteration_bounds = array<i64: 1>, scalar_prefetch = 0 : i64, scratch_operands = 0 : i64, tpu.core_type = #tpu.core_type<tc>, window_params = [{transform_indices = @transform_0, window_bounds = array<i64: 2>}, {transform_indices = @transform_1, window_bounds = array<i64: 8, 8>}, {transform_indices = @transform_2, window_bounds = array<i64: 8, 5>}, {pipeline_mode = #tpu.pipeline_mode<synchronous>, transform_indices = @transform_3, window_bounds = array<i64: 8, 64>}, {pipeline_mode = #tpu.pipeline_mode<synchronous>, transform_indices = @transform_4, window_bounds = array<i64: 1, 64>}, {pipeline_mode = #tpu.pipeline_mode<synchronous>, transform_indices = @transform_5, window_bounds = array<i64: 64, 64>}, {pipeline_mode = #tpu.pipeline_mode<synchronous>, transform_indices = @transform_6, window_bounds = array<i64: 1, 64>}, {pipeline_mode = #tpu.pipeline_mode<synchronous>, transform_indices = @transform_7, window_bounds = array<i64: 64, 5>}, {pipeline_mode = #tpu.pipeline_mode<synchronous>, transform_indices = @transform_8, window_bounds = array<i64: 1, 5>}, {transform_indices = @transform_9, window_bounds = array<i64: 8, 5>}]} {
    %c0 = arith.constant 0 : index
    %c0_0 = arith.constant 0 : index
    %0 = vector.load %arg2[%c0, %c0_0] : memref<8x8xf32, #tpu.memory_space<vmem>>, vector<8x8xf32>
    %c0_1 = arith.constant 0 : index
    %c0_2 = arith.constant 0 : index
    %1 = vector.load %arg3[%c0_1, %c0_2] : memref<8x5xf32, #tpu.memory_space<vmem>>, vector<8x5xf32>
    %c0_3 = arith.constant 0 : index
    %2 = memref.load %arg1[%c0_3] : memref<2xf32, #tpu.memory_space<smem>>
    %c1 = arith.constant 1 : index
    %3 = memref.load %arg1[%c1] : memref<2xf32, #tpu.memory_space<smem>>
    %c0_4 = arith.constant 0 : index
    %c0_5 = arith.constant 0 : index
    %4 = vector.load %arg4[%c0_4, %c0_5] : memref<8x64xf32, #tpu.memory_space<vmem>>, vector<8x64xf32>
    %cst = arith.constant dense<0.000000e+00> : vector<8x64xf32>
    %5 = tpu.matmul %0, %4, %cst {dimension_numbers = #tpu.dot_dimension_numbers<[1], [0], [0], [1], [0, 0, 1, 1], [], []>} : vector<8x8xf32>, vector<8x64xf32>, vector<8x64xf32> -> vector<8x64xf32>
    %c0_6 = arith.constant 0 : index
    %c0_7 = arith.constant 0 : index
    %6 = vector.load %arg5[%c0_6, %c0_7] : memref<1x64xf32, #tpu.memory_space<vmem>>, vector<1x64xf32>
    %7 = vector.broadcast %6 : vector<1x64xf32> to vector<8x64xf32>
    %8 = arith.addf %5, %7 : vector<8x64xf32>
    %9 = math.tanh %8 : vector<8x64xf32>
    %c0_8 = arith.constant 0 : index
    %c0_9 = arith.constant 0 : index
    %10 = vector.load %arg6[%c0_8, %c0_9] : memref<64x64xf32, #tpu.memory_space<vmem>>, vector<64x64xf32>
    %cst_10 = arith.constant dense<0.000000e+00> : vector<8x64xf32>
    %11 = tpu.matmul %9, %10, %cst_10 {dimension_numbers = #tpu.dot_dimension_numbers<[1], [0], [0], [1], [0, 0, 1, 1], [], []>} : vector<8x64xf32>, vector<64x64xf32>, vector<8x64xf32> -> vector<8x64xf32>
    %c0_11 = arith.constant 0 : index
    %c0_12 = arith.constant 0 : index
    %12 = vector.load %arg7[%c0_11, %c0_12] : memref<1x64xf32, #tpu.memory_space<vmem>>, vector<1x64xf32>
    %13 = vector.broadcast %12 : vector<1x64xf32> to vector<8x64xf32>
    %14 = arith.addf %11, %13 : vector<8x64xf32>
    %15 = math.tanh %14 : vector<8x64xf32>
    %c0_13 = arith.constant 0 : index
    %c0_14 = arith.constant 0 : index
    %16 = vector.load %arg8[%c0_13, %c0_14] : memref<64x5xf32, #tpu.memory_space<vmem>>, vector<64x5xf32>
    %cst_15 = arith.constant dense<0.000000e+00> : vector<8x5xf32>
    %17 = tpu.matmul %15, %16, %cst_15 {dimension_numbers = #tpu.dot_dimension_numbers<[1], [0], [0], [1], [0, 0, 1, 1], [], []>} : vector<8x64xf32>, vector<64x5xf32>, vector<8x5xf32> -> vector<8x5xf32>
    %c0_16 = arith.constant 0 : index
    %c0_17 = arith.constant 0 : index
    %18 = vector.load %arg9[%c0_16, %c0_17] : memref<1x5xf32, #tpu.memory_space<vmem>>, vector<1x5xf32>
    %19 = vector.broadcast %18 : vector<1x5xf32> to vector<8x5xf32>
    %20 = arith.addf %17, %19 : vector<8x5xf32>
    %21 = math.tanh %20 : vector<8x5xf32>
    %22 = arith.subf %1, %21 : vector<8x5xf32>
    %23 = arith.mulf %22, %22 : vector<8x5xf32>
    %24 = vector.broadcast %2 : f32 to vector<8x5xf32>
    %25 = arith.mulf %23, %24 : vector<8x5xf32>
    %26 = vector.broadcast %3 : f32 to vector<8x5xf32>
    %27 = arith.addf %25, %26 : vector<8x5xf32>
    %28 = tpu.iota {dimensions = array<i32: 1>} : vector<8x5xi32>
    %c4_i32 = arith.constant 4 : i32
    %29 = vector.broadcast %c4_i32 : i32 to vector<8x5xi32>
    %30 = arith.cmpi slt, %28, %29 : vector<8x5xi32>
    %31 = arith.select %30, %27, %20 : vector<8x5xi1>, vector<8x5xf32>
    %c0_18 = arith.constant 0 : index
    %c0_19 = arith.constant 0 : index
    %32 = vector.load %arg10[%c0_18, %c0_19] : memref<8x5xf32, #tpu.memory_space<vmem>>, vector<8x5xf32>
    tpu.vector_store %arg10[%c0_18, %c0_19], %31 {strides = array<i32>} : memref<8x5xf32, #tpu.memory_space<vmem>>, vector<8x5xf32>,
    return
  }
  func.func @transform_0(%arg0: i32) -> i32 {
    %c0_i32 = arith.constant 0 : i32
    %c0_i32_0 = arith.constant 0 : i32
    return %c0_i32 : i32
  }
  func.func @transform_1(%arg0: i32) -> (i32, i32) {
    %c0_i32 = arith.constant 0 : i32
    %c0_i32_0 = arith.constant 0 : i32
    return %arg0, %c0_i32 : i32, i32
  }
  func.func @transform_2(%arg0: i32) -> (i32, i32) {
    %c0_i32 = arith.constant 0 : i32
    %c0_i32_0 = arith.constant 0 : i32
    return %arg0, %c0_i32 : i32, i32
  }
  func.func @transform_3(%arg0: i32) -> (i32, i32) {
    %c0_i32 = arith.constant 0 : i32
    %c0_i32_0 = arith.constant 0 : i32
    %c0_i32_1 = arith.constant 0 : i32
    return %c0_i32, %c0_i32_0 : i32, i32
  }
  func.func @transform_4(%arg0: i32) -> (i32, i32) {
    %c0_i32 = arith.constant 0 : i32
    %c0_i32_0 = arith.constant 0 : i32
    %c0_i32_1 = arith.constant 0 : i32
    return %c0_i32, %c0_i32_0 : i32, i32
  }
  func.func @transform_5(%arg0: i32) -> (i32, i32) {
    %c0_i32 = arith.constant 0 : i32
    %c0_i32_0 = arith.constant 0 : i32
    %c0_i32_1 = arith.constant 0 : i32
    return %c0_i32, %c0_i32_0 : i32, i32
  }
  func.func @transform_6(%arg0: i32) -> (i32, i32) {
    %c0_i32 = arith.constant 0 : i32
    %c0_i32_0 = arith.constant 0 : i32
    %c0_i32_1 = arith.constant 0 : i32
    return %c0_i32, %c0_i32_0 : i32, i32
  }
  func.func @transform_7(%arg0: i32) -> (i32, i32) {
    %c0_i32 = arith.constant 0 : i32
    %c0_i32_0 = arith.constant 0 : i32
    %c0_i32_1 = arith.constant 0 : i32
    return %c0_i32, %c0_i32_0 : i32, i32
  }
  func.func @transform_8(%arg0: i32) -> (i32, i32) {
    %c0_i32 = arith.constant 0 : i32
    %c0_i32_0 = arith.constant 0 : i32
    %c0_i32_1 = arith.constant 0 : i32
    return %c0_i32, %c0_i32_0 : i32, i32
  }
  func.func @transform_9(%arg0: i32) -> (i32, i32) {
    %c0_i32 = arith.constant 0 : i32
    %c0_i32_0 = arith.constant 0 : i32
    return %arg0, %c0_i32 : i32, i32
  }
}

</mosaic_0001>

<llo_original>
// kernel: tpu_custom_call.1
$region0: #{tpu_custom_call.1}
  #allocation0 [shape = 'u32[]', space=smem, size = 0x4, offset = 0x4, fixed_abs, tag = 'smem constant byte address 0x4 - core index']
  #allocation1 [shape = 'u32[144,128]{1,0:T(1,128)}', space=vmem, size = 0x12000, scoped, tag = 'internal scratch']
  %s0 = inlined_call_operand.hbm [shape: f32[2], index: 0, kind: input, shape index: {}]
  %s1 = inlined_call_operand.hbm [shape: f32[8,8], index: 1, kind: input, shape index: {}]
  %s2 = inlined_call_operand.hbm [shape: f32[8,5], index: 2, kind: input, shape index: {}]
  %s3 = inlined_call_operand.hbm [shape: f32[8,64], index: 3, kind: input, shape index: {}]
  %s4 = inlined_call_operand.hbm [shape: f32[1,64], index: 4, kind: input, shape index: {}]
  %s5 = inlined_call_operand.hbm [shape: f32[64,64], index: 5, kind: input, shape index: {}]
  %s6 = inlined_call_operand.hbm [shape: f32[1,64], index: 6, kind: input, shape index: {}]
  %s7 = inlined_call_operand.hbm [shape: f32[64,5], index: 7, kind: input, shape index: {}]
  %s8 = inlined_call_operand.hbm [shape: f32[1,5], index: 8, kind: input, shape index: {}]
  %s9 = inlined_call_operand.hbm [shape: f32[8,5], index: 9, kind: output, shape index: {}]
  %s10 = sld [smem:[#allocation0]]
  $region82: #{tpu_custom_call.1} parent=0
    _
  %s12 = ssub.s32 1, %s10
  %s13 = scalar_select 0, %s12, %s10
  $region1: #{tpu_custom_call.1} parent=0
    #allocation2 [shape = 'u8[512]{0}', space=smem, size = 0x200, scoped, tag = 'input window, operand 0, single buffered']
    #allocation3 [shape = 's32[1]{0}', space=sflag, size = 0x4, scoped, tag = 'scoped memory for tpu_custom_call.1']
    #allocation4 [shape = 's32[1]{0}', space=sflag, size = 0x4, scoped, tag = 'scoped memory for tpu_custom_call.1']
    #allocation5 [shape = 's32[1]{0}', space=sflag, size = 0x4, scoped, tag = 'scoped memory for tpu_custom_call.1']
    #allocation6 [shape = 'u8[4096]{0}', space=vmem, size = 0x1000, scoped, tag = 'input window, operand 1, single buffered']
    #allocation7 [shape = 'u8[4096]{0}', space=vmem, size = 0x1000, scoped, tag = 'input window, operand 2, single buffered']
    #allocation8 [shape = 's32[1]{0}', space=sflag, size = 0x4, scoped, tag = 'scoped memory for tpu_custom_call.1']
    #allocation9 [shape = 'u8[4096]{0}', space=vmem, size = 0x1000, scoped, tag = 'input window, operand 3, single buffered']
    #allocation10 [shape = 'u8[512]{0}', space=vmem, size = 0x400, scoped, tag = 'input window, operand 4, single buffered']
    #allocation11 [shape = 's32[1]{0}', space=sflag, size = 0x4, scoped, tag = 'scoped memory for tpu_custom_call.1']
    #allocation12 [shape = 'u8[32768]{0}', space=vmem, size = 0x8000, scoped, tag = 'input window, operand 5, single buffered']
    #allocation13 [shape = 'u8[512]{0}', space=vmem, size = 0x400, scoped, tag = 'input window, operand 6, single buffered']
    #allocation14 [shape = 's32[1]{0}', space=sflag, size = 0x4, scoped, tag = 'scoped memory for tpu_custom_call.1']
    #allocation15 [shape = 'u8[32768]{0}', space=vmem, size = 0x8000, scoped, tag = 'input window, operand 7, single buffered']
    #allocation16 [shape = 'u8[512]{0}', space=vmem, size = 0x400, scoped, tag = 'input window, operand 8, single buffered']
    #allocation17 [shape = 's32[1]{0}', space=sflag, size = 0x4, scoped, tag = 'scoped memory for tpu_custom_call.1']
    #allocation18 [shape = 'u8[4096]{0}', space=vmem, size = 0x1000, scoped, tag = 'output window, operand 0, single buffered']
    %14 = vsyncpa [#allocation5], 0
    %15 = vsyncpa [#allocation3], 0
    %16 = vsyncpa [#allocation8], 0
    %17 = vsyncpa [#allocation11], 0
    %18 = vsyncpa [#allocation14], 0
    %19 = vsyncpa [#allocation17], 0
    %20 = vsyncpa [#allocation4], 0
    // Predicated region
    $region2: #{tpu_custom_call.1} parent=1 // pred_check
      _
    $region3: #{tpu_custom_call.1} parent=1 // pred_check_branch
      %22 = sbr.rel (0) target = $region5
    $region4: #{tpu_custom_call.1} parent=1 // pred_region
      %s24 = ssub.s32 16, 16
      %25 = vsyncadd [#allocation5], %s24
      %28 = dma.hbm_to_smem %s0, 16, [#allocation2], [#allocation5]
    $region5: #{tpu_custom_call.1} parent=1 // pred_fallthru
      _
    // Predicated region
    $region6: #{tpu_custom_call.1} parent=1 // pred_check
      _
    $region7: #{tpu_custom_call.1} parent=1 // pred_check_branch
      %30 = sbr.rel (0) target = $region9
    $region8: #{tpu_custom_call.1} parent=1 // pred_region
      %s32 = ssub.s32 128, 128
      %33 = vsyncadd [#allocation3], %s32
      %s35 = sshll.u32 [#allocation6], 4
      %s36 = int_to_ptr.vmem [resolvable:$true] %s35
      %38 = dma.hbm_to_vmem [thread:$0]  %s1, 128, %s36, [#allocation3]
    $region9: #{tpu_custom_call.1} parent=1 // pred_fallthru
      _
    // Predicated region
    $region10: #{tpu_custom_call.1} parent=1 // pred_check
      _
    $region11: #{tpu_custom_call.1} parent=1 // pred_check_branch
      %40 = sbr.rel (0) target = $region13
    $region12: #{tpu_custom_call.1} parent=1 // pred_region
      %s42 = ssub.s32 128, 128
      %43 = vsyncadd [#allocation8], %s42
      %s45 = sshll.u32 [#allocation7], 4
      %s46 = int_to_ptr.vmem [resolvable:$true] %s45
      %48 = dma.hbm_to_vmem [thread:$0]  %s2, 128, %s46, [#allocation8]
    $region13: #{tpu_custom_call.1} parent=1 // pred_fallthru
      _
    // Predicated region
    $region14: #{tpu_custom_call.1} parent=1 // pred_check
      _
    $region15: #{tpu_custom_call.1} parent=1 // pred_check_branch
      %50 = sbr.rel (0) target = $region17
    $region16: #{tpu_custom_call.1} parent=1 // pred_region
      %s52 = ssub.s32 128, 128
      %53 = vsyncadd [#allocation8], %s52
      %s55 = sshll.u32 [#allocation9], 4
      %s56 = int_to_ptr.vmem [resolvable:$true] %s55
      %58 = dma.hbm_to_vmem [thread:$0]  %s3, 128, %s56, [#allocation8]
    $region17: #{tpu_custom_call.1} parent=1 // pred_fallthru
      _
    // Predicated region
    $region18: #{tpu_custom_call.1} parent=1 // pred_check
      _
    $region19: #{tpu_custom_call.1} parent=1 // pred_check_branch
      %60 = sbr.rel (0) target = $region21
    $region20: #{tpu_custom_call.1} parent=1 // pred_region
      %s62 = ssub.s32 16, 16
      %63 = vsyncadd [#allocation11], %s62
      %s65 = sshll.u32 [#allocation10], 4
      %s66 = int_to_ptr.vmem [resolvable:$true] %s65
      %68 = dma.hbm_to_vmem [thread:$0]  %s4, 16, %s66, [#allocation11]
    $region21: #{tpu_custom_call.1} parent=1 // pred_fallthru
      _
    // Predicated region
    $region22: #{tpu_custom_call.1} parent=1 // pred_check
      _
    $region23: #{tpu_custom_call.1} parent=1 // pred_check_branch
      %70 = sbr.rel (0) target = $region25
    $region24: #{tpu_custom_call.1} parent=1 // pred_region
      %s72 = ssub.s32 1024, 1024
      %73 = vsyncadd [#allocation11], %s72
      %s74 = sshll.u32 [#allocation12], 4
      %s75 = int_to_ptr.vmem [resolvable:$true] %s74
      %80 = dma.hbm_to_vmem [thread:$0]  %s5, 1024, %s75, [#allocation11], 128, 128, 8
    $region25: #{tpu_custom_call.1} parent=1 // pred_fallthru
      _
    // Predicated region
    $region26: #{tpu_custom_call.1} parent=1 // pred_check
      _
    $region27: #{tpu_custom_call.1} parent=1 // pred_check_branch
      %82 = sbr.rel (0) target = $region29
    $region28: #{tpu_custom_call.1} parent=1 // pred_region
      %s84 = ssub.s32 16, 16
      %85 = vsyncadd [#allocation14], %s84
      %s87 = sshll.u32 [#allocation13], 4
      %s88 = int_to_ptr.vmem [resolvable:$true] %s87
      %90 = dma.hbm_to_vmem [thread:$0]  %s6, 16, %s88, [#allocation14]
    $region29: #{tpu_custom_call.1} parent=1 // pred_fallthru
      _
    // Predicated region
    $region30: #{tpu_custom_call.1} parent=1 // pred_check
      _
    $region31: #{tpu_custom_call.1} parent=1 // pred_check_branch
      %92 = sbr.rel (0) target = $region33
    $region32: #{tpu_custom_call.1} parent=1 // pred_region
      %s94 = ssub.s32 1024, 1024
      %95 = vsyncadd [#allocation14], %s94
      %s96 = sshll.u32 [#allocation15], 4
      %s97 = int_to_ptr.vmem [resolvable:$true] %s96
      %102 = dma.hbm_to_vmem [thread:$0]  %s7, 1024, %s97, [#allocation14], 128, 128, 8
    $region33: #{tpu_custom_call.1} parent=1 // pred_fallthru
      _
    // Predicated region
    $region34: #{tpu_custom_call.1} parent=1 // pred_check
      _
    $region35: #{tpu_custom_call.1} parent=1 // pred_check_branch
      %104 = sbr.rel (0) target = $region37
    $region36: #{tpu_custom_call.1} parent=1 // pred_region
      %s106 = ssub.s32 16, 16
      %107 = vsyncadd [#allocation17], %s106
      %s109 = sshll.u32 [#allocation16], 4
      %s110 = int_to_ptr.vmem [resolvable:$true] %s109
      %112 = dma.hbm_to_vmem [thread:$0]  %s8, 16, %s110, [#allocation17]
    $region37: #{tpu_custom_call.1} parent=1 // pred_fallthru
      _
    // Predicated region
    $region38: #{tpu_custom_call.1} parent=1 // pred_check
      _
    $region39: #{tpu_custom_call.1} parent=1 // pred_check_branch
      %114 = sbr.rel (0) target = $region41
    $region40: #{tpu_custom_call.1} parent=1 // pred_region
      %115 = dma.done [#allocation5], 16
    $region41: #{tpu_custom_call.1} parent=1 // pred_fallthru
      _
    // Predicated region
    $region42: #{tpu_custom_call.1} parent=1 // pred_check
      _
    $region43: #{tpu_custom_call.1} parent=1 // pred_check_branch
      %117 = sbr.rel (0) target = $region45
    $region44: #{tpu_custom_call.1} parent=1 // pred_region
      %118 = dma.done [#allocation3], 128
    $region45: #{tpu_custom_call.1} parent=1 // pred_fallthru
      _
    // Predicated region
    $region46: #{tpu_custom_call.1} parent=1 // pred_check
      _
    $region47: #{tpu_custom_call.1} parent=1 // pred_check_branch
      %120 = sbr.rel (0) target = $region49
    $region48: #{tpu_custom_call.1} parent=1 // pred_region
      %121 = dma.done [#allocation8], 128
    $region49: #{tpu_custom_call.1} parent=1 // pred_fallthru
      _
    // Predicated region
    $region50: #{tpu_custom_call.1} parent=1 // pred_check
      _
    $region51: #{tpu_custom_call.1} parent=1 // pred_check_branch
      %123 = sbr.rel (0) target = $region53
    $region52: #{tpu_custom_call.1} parent=1 // pred_region
      %124 = dma.done [#allocation8], 128
    $region53: #{tpu_custom_call.1} parent=1 // pred_fallthru
      _
    // Predicated region
    $region54: #{tpu_custom_call.1} parent=1 // pred_check
      _
    $region55: #{tpu_custom_call.1} parent=1 // pred_check_branch
      %126 = sbr.rel (0) target = $region57
    $region56: #{tpu_custom_call.1} parent=1 // pred_region
      %127 = dma.done [#allocation11], 16
    $region57: #{tpu_custom_call.1} parent=1 // pred_fallthru
      _
    // Predicated region
    $region58: #{tpu_custom_call.1} parent=1 // pred_check
      _
    $region59: #{tpu_custom_call.1} parent=1 // pred_check_branch
      %129 = sbr.rel (0) target = $region61
    $region60: #{tpu_custom_call.1} parent=1 // pred_region
      %130 = dma.done [#allocation11], 1024
    $region61: #{tpu_custom_call.1} parent=1 // pred_fallthru
      _
    // Predicated region
    $region62: #{tpu_custom_call.1} parent=1 // pred_check
      _
    $region63: #{tpu_custom_call.1} parent=1 // pred_check_branch
      %132 = sbr.rel (0) target = $region65
    $region64: #{tpu_custom_call.1} parent=1 // pred_region
      %133 = dma.done [#allocation14], 16
    $region65: #{tpu_custom_call.1} parent=1 // pred_fallthru
      _
    // Predicated region
    $region66: #{tpu_custom_call.1} parent=1 // pred_check
      _
    $region67: #{tpu_custom_call.1} parent=1 // pred_check_branch
      %135 = sbr.rel (0) target = $region69
    $region68: #{tpu_custom_call.1} parent=1 // pred_region
      %136 = dma.done [#allocation14], 1024
    $region69: #{tpu_custom_call.1} parent=1 // pred_fallthru
      _
    // Predicated region
    $region70: #{tpu_custom_call.1} parent=1 // pred_check
      _
    $region71: #{tpu_custom_call.1} parent=1 // pred_check_branch
      %138 = sbr.rel (0) target = $region73
    $region72: #{tpu_custom_call.1} parent=1 // pred_region
      %139 = dma.done [#allocation17], 16
    $region73: #{tpu_custom_call.1} parent=1 // pred_fallthru
      _
    %140 = sfence
    %v141 = vld [vmem:[#allocation6] sm:$0xff]
    %v142 = vld [vmem:[#allocation7] sm:$0xff]
    %s143 = sld [smem:[#allocation2]]
    %s144 = sld [smem:[#allocation2 + $0x1]]
    %v145 = vld [vmem:[#allocation9] sm:$0xff]
    %v146 = vld [vmem:[#allocation10] sm:$0x1]
    %v148 = vlaneseq
    %v149 = vshrl.u32 %v148, 7
    %v150 = vsub.s32 0, %v149
    %v151 = vrot.slane %v146, %v150
    %vm153 = vcmask 64512
    %v155 = vsel %vm153, %v141, 0
    %157 = vmatprep.subr.mxu0 0.0
    %158 = vmatpush1.msra.mxu0 %v145
    %159 = vmatprep.subr.mxu0 0.0
    %160 = vmatpush1.msra.mxu0 0.0
    %161 = vmatprep.subr.mxu0 0.0
    %162 = vmatpush1.msra.mxu0 0.0
    %163 = vmatprep.subr.mxu0 0.0
    %164 = vmatpush1.msra.mxu0 0.0
    %165 = vmatprep.subr.mxu0 0.0
    %166 = vmatpush1.msra.mxu0 0.0
    %167 = vmatprep.subr.mxu0 0.0
    %168 = vmatpush1.msra.mxu0 0.0
    %169 = vmatprep.subr.mxu0 0.0
    %170 = vmatpush1.msra.mxu0 0.0
    %171 = vmatprep.subr.mxu0 0.0
    %172 = vmatpush1.msra.mxu0 0.0
    %173 = vmatprep.subr.mxu0 0.0
    %174 = vmatpush1.msra.mxu0 0.0
    %175 = vmatprep.subr.mxu0 0.0
    %176 = vmatpush1.msra.mxu0 0.0
    %177 = vmatprep.subr.mxu0 0.0
    %178 = vmatpush1.msra.mxu0 0.0
    %179 = vmatprep.subr.mxu0 0.0
    %180 = vmatpush1.msra.mxu0 0.0
    %181 = vmatprep.subr.mxu0 0.0
    %182 = vmatpush1.msra.mxu0 0.0
    %183 = vmatprep.subr.mxu0 0.0
    %184 = vmatpush1.msra.mxu0 0.0
    %185 = vmatprep.subr.mxu0 0.0
    %186 = vmatpush1.msra.mxu0 0.0
    %187 = vmatprep.subr.mxu0 0.0
    %188 = vmatpush1.msra.mxu0 0.0
    %189 = vmatprep.subr.mxu0 0.0
    %190 = vmatpush1.msra.mxu0 0.0
    %191 = vmatprep.subr.mxu0 0.0
    %192 = vmatpush1.msra.mxu0 0.0
    %193 = vmatprep.subr.mxu0 0.0
    %194 = vmatpush1.msra.mxu0 0.0
    %195 = vmatprep.subr.mxu0 0.0
    %196 = vmatpush1.msra.mxu0 0.0
    %197 = vmatprep.subr.mxu0 0.0
    %198 = vmatpush1.msra.mxu0 0.0
    %199 = vmatprep.subr.mxu0 0.0
    %200 = vmatpush1.msra.mxu0 0.0
    %201 = vmatprep.subr.mxu0 0.0
    %202 = vmatpush1.msra.mxu0 0.0
    %203 = vmatprep.subr.mxu0 0.0
    %204 = vmatpush1.msra.mxu0 0.0
    %205 = vmatprep.subr.mxu0 0.0
    %206 = vmatpush1.msra.mxu0 0.0
    %207 = vmatprep.subr.mxu0 0.0
    %208 = vmatpush1.msra.mxu0 0.0
    %209 = vmatprep.subr.mxu0 0.0
    %210 = vmatpush1.msra.mxu0 0.0
    %211 = vmatprep.subr.mxu0 0.0
    %212 = vmatpush1.msra.mxu0 0.0
    %213 = vmatprep.subr.mxu0 0.0
    %214 = vmatpush1.msra.mxu0 0.0
    %215 = vmatprep.subr.mxu0 0.0
    %216 = vmatpush1.msra.mxu0 0.0
    %217 = vmatprep.subr.mxu0 0.0
    %218 = vmatpush1.msra.mxu0 0.0
    %219 = vmatprep.subr.mxu0 0.0
    %220 = vmatpush1.msra.mxu0 0.0
    %221 = vmatprep.mubr.f32.mxu0 0.0
    %222 = vmatmul.mubr.f32.gmra.mrb[0].mxu0 %v155
    %v223 = vpop.f32.mrb[0].mxu0
    %v224 = vadd.f32 %v151, %v223
    %v225 = vpop.f32.mrb[0].mxu0
    %226 = vdwg.mxu0
    %v227 = vtanh.pop %v224
    %v228 = vld [vmem:[#allocation12] sm:$0xff]
    %v229 = vld [vmem:[#allocation12 + $0x8] sm:$0xff]
    %v230 = vld [vmem:[#allocation12 + $0x10] sm:$0xff]
    %v231 = vld [vmem:[#allocation12 + $0x18] sm:$0xff]
    %v232 = vld [vmem:[#allocation12 + $0x20] sm:$0xff]
    %v233 = vld [vmem:[#allocation12 + $0x28] sm:$0xff]
    %v234 = vld [vmem:[#allocation12 + $0x30] sm:$0xff]
    %v235 = vld [vmem:[#allocation12 + $0x38] sm:$0xff]
    %v236 = vld [vmem:[#allocation13] sm:$0x1]
    %v238 = vlaneseq
    %v239 = vshrl.u32 %v238, 7
    %v240 = vsub.s32 0, %v239
    %v241 = vrot.slane %v236, %v240
    %vm243 = vcmask 523264
    %v245 = vsel %vm243, %v227, 0
    %247 = vmatprep.subr.mxu0 0.0
    %248 = vmatpush1.msra.mxu0 %v228
    %249 = vmatprep.subr.mxu0 0.0
    %250 = vmatpush1.msra.mxu0 %v229
    %251 = vmatprep.subr.mxu0 0.0
    %252 = vmatpush1.msra.mxu0 %v230
    %253 = vmatprep.subr.mxu0 0.0
    %254 = vmatpush1.msra.mxu0 %v231
    %255 = vmatprep.subr.mxu0 0.0
    %256 = vmatpush1.msra.mxu0 %v232
    %257 = vmatprep.subr.mxu0 0.0
    %258 = vmatpush1.msra.mxu0 %v233
    %259 = vmatprep.subr.mxu0 0.0
    %260 = vmatpush1.msra.mxu0 %v234
    %261 = vmatprep.subr.mxu0 0.0
    %262 = vmatpush1.msra.mxu0 %v235
    %263 = vmatprep.subr.mxu0 0.0
    %264 = vmatpush1.msra.mxu0 0.0
    %265 = vmatprep.subr.mxu0 0.0
    %266 = vmatpush1.msra.mxu0 0.0
    %267 = vmatprep.subr.mxu0 0.0
    %268 = vmatpush1.msra.mxu0 0.0
    %269 = vmatprep.subr.mxu0 0.0
    %270 = vmatpush1.msra.mxu0 0.0
    %271 = vmatprep.subr.mxu0 0.0
    %272 = vmatpush1.msra.mxu0 0.0
    %273 = vmatprep.subr.mxu0 0.0
    %274 = vmatpush1.msra.mxu0 0.0
    %275 = vmatprep.subr.mxu0 0.0
    %276 = vmatpush1.msra.mxu0 0.0
    %277 = vmatprep.subr.mxu0 0.0
    %278 = vmatpush1.msra.mxu0 0.0
    %279 = vmatprep.subr.mxu0 0.0
    %280 = vmatpush1.msra.mxu0 0.0
    %281 = vmatprep.subr.mxu0 0.0
    %282 = vmatpush1.msra.mxu0 0.0
    %283 = vmatprep.subr.mxu0 0.0
    %284 = vmatpush1.msra.mxu0 0.0
    %285 = vmatprep.subr.mxu0 0.0
    %286 = vmatpush1.msra.mxu0 0.0
    %287 = vmatprep.subr.mxu0 0.0
    %288 = vmatpush1.msra.mxu0 0.0
    %289 = vmatprep.subr.mxu0 0.0
    %290 = vmatpush1.msra.mxu0 0.0
    %291 = vmatprep.subr.mxu0 0.0
    %292 = vmatpush1.msra.mxu0 0.0
    %293 = vmatprep.subr.mxu0 0.0
    %294 = vmatpush1.msra.mxu0 0.0
    %295 = vmatprep.subr.mxu0 0.0
    %296 = vmatpush1.msra.mxu0 0.0
    %297 = vmatprep.subr.mxu0 0.0
    %298 = vmatpush1.msra.mxu0 0.0
    %299 = vmatprep.subr.mxu0 0.0
    %300 = vmatpush1.msra.mxu0 0.0
    %301 = vmatprep.subr.mxu0 0.0
    %302 = vmatpush1.msra.mxu0 0.0
    %303 = vmatprep.subr.mxu0 0.0
    %304 = vmatpush1.msra.mxu0 0.0
    %305 = vmatprep.subr.mxu0 0.0
    %306 = vmatpush1.msra.mxu0 0.0
    %307 = vmatprep.subr.mxu0 0.0
    %308 = vmatpush1.msra.mxu0 0.0
    %309 = vmatprep.subr.mxu0 0.0
    %310 = vmatpush1.msra.mxu0 0.0
    %311 = vmatprep.mubr.f32.mxu0 0.0
    %312 = vmatmul.mubr.f32.gmra.mrb[0].mxu0 %v245
    %v313 = vpop.f32.mrb[0].mxu0
    %v314 = vadd.f32 %v241, %v313
    %v315 = vpop.f32.mrb[0].mxu0
    %316 = vdwg.mxu0
    %v317 = vtanh.pop %v314
    %v318 = vld [vmem:[#allocation15] sm:$0xff]
    %v319 = vld [vmem:[#allocation15 + $0x8] sm:$0xff]
    %v320 = vld [vmem:[#allocation15 + $0x10] sm:$0xff]
    %v321 = vld [vmem:[#allocation15 + $0x18] sm:$0xff]
    %v322 = vld [vmem:[#allocation15 + $0x20] sm:$0xff]
    %v323 = vld [vmem:[#allocation15 + $0x28] sm:$0xff]
    %v324 = vld [vmem:[#allocation15 + $0x30] sm:$0xff]
    %v325 = vld [vmem:[#allocation15 + $0x38] sm:$0xff]
    %v326 = vld [vmem:[#allocation16] sm:$0x1]
    %v328 = vlaneseq
    %v329 = vshrl.u32 %v328, 7
    %v330 = vsub.s32 0, %v329
    %v331 = vrot.slane %v326, %v330
    %v334 = vsel %vm243, %v317, 0
    %336 = vmatprep.subr.mxu0 0.0
    %337 = vmatpush1.msra.mxu0 %v318
    %338 = vmatprep.subr.mxu0 0.0
    %339 = vmatpush1.msra.mxu0 %v319
    %340 = vmatprep.subr.mxu0 0.0
    %341 = vmatpush1.msra.mxu0 %v320
    %342 = vmatprep.subr.mxu0 0.0
    %343 = vmatpush1.msra.mxu0 %v321
    %344 = vmatprep.subr.mxu0 0.0
    %345 = vmatpush1.msra.mxu0 %v322
    %346 = vmatprep.subr.mxu0 0.0
    %347 = vmatpush1.msra.mxu0 %v323
    %348 = vmatprep.subr.mxu0 0.0
    %349 = vmatpush1.msra.mxu0 %v324
    %350 = vmatprep.subr.mxu0 0.0
    %351 = vmatpush1.msra.mxu0 %v325
    %352 = vmatprep.subr.mxu0 0.0
    %353 = vmatpush1.msra.mxu0 0.0
    %354 = vmatprep.subr.mxu0 0.0
    %355 = vmatpush1.msra.mxu0 0.0
    %356 = vmatprep.subr.mxu0 0.0
    %357 = vmatpush1.msra.mxu0 0.0
    %358 = vmatprep.subr.mxu0 0.0
    %359 = vmatpush1.msra.mxu0 0.0
    %360 = vmatprep.subr.mxu0 0.0
    %361 = vmatpush1.msra.mxu0 0.0
    %362 = vmatprep.subr.mxu0 0.0
    %363 = vmatpush1.msra.mxu0 0.0
    %364 = vmatprep.subr.mxu0 0.0
    %365 = vmatpush1.msra.mxu0 0.0
    %366 = vmatprep.subr.mxu0 0.0
    %367 = vmatpush1.msra.mxu0 0.0
    %368 = vmatprep.subr.mxu0 0.0
    %369 = vmatpush1.msra.mxu0 0.0
    %370 = vmatprep.subr.mxu0 0.0
    %371 = vmatpush1.msra.mxu0 0.0
    %372 = vmatprep.subr.mxu0 0.0
    %373 = vmatpush1.msra.mxu0 0.0
    %374 = vmatprep.subr.mxu0 0.0
    %375 = vmatpush1.msra.mxu0 0.0
    %376 = vmatprep.subr.mxu0 0.0
    %377 = vmatpush1.msra.mxu0 0.0
    %378 = vmatprep.subr.mxu0 0.0
    %379 = vmatpush1.msra.mxu0 0.0
    %380 = vmatprep.subr.mxu0 0.0
    %381 = vmatpush1.msra.mxu0 0.0
    %382 = vmatprep.subr.mxu0 0.0
    %383 = vmatpush1.msra.mxu0 0.0
    %384 = vmatprep.subr.mxu0 0.0
    %385 = vmatpush1.msra.mxu0 0.0
    %386 = vmatprep.subr.mxu0 0.0
    %387 = vmatpush1.msra.mxu0 0.0
    %388 = vmatprep.subr.mxu0 0.0
    %389 = vmatpush1.msra.mxu0 0.0
    %390 = vmatprep.subr.mxu0 0.0
    %391 = vmatpush1.msra.mxu0 0.0
    %392 = vmatprep.subr.mxu0 0.0
    %393 = vmatpush1.msra.mxu0 0.0
    %394 = vmatprep.subr.mxu0 0.0
    %395 = vmatpush1.msra.mxu0 0.0
    %396 = vmatprep.subr.mxu0 0.0
    %397 = vmatpush1.msra.mxu0 0.0
    %398 = vmatprep.subr.mxu0 0.0
    %399 = vmatpush1.msra.mxu0 0.0
    %400 = vmatprep.mubr.f32.mxu0 0.0
    %401 = vmatmul.mubr.f32.gmra.mrb[0].mxu0 %v334
    %v402 = vpop.f32.mrb[0].mxu0
    %v403 = vadd.f32 %v331, %v402
    %v404 = vpop.f32.mrb[0].mxu0
    %405 = vdwg.mxu0
    %v406 = vtanh.pop %v403
    %v407 = vsub.f32 %v142, %v406
    %v408 = vmul.f32 %v407, %v407
    %v409 = vstv %s143
    %v410 = vmul.f32 %v408, %v409
    %v411 = vstv %s144
    %v412 = vadd.f32 %v410, %v411
    %v413 = vlaneseq
    %v414 = vand.u32 %v413, 127
    %vm415 = vcmp.lt.s32.totalorder %v414, 4
    %v416 = vsel %vm415, %v412, %v403
    %vm417 = vcmask 39936
    %418 = vst.msk [vmem:[#allocation18] sm:$0xff] %vm417, %v416
    // Predicated region
    $region74: #{tpu_custom_call.1} parent=1 // pred_check
      _
    $region75: #{tpu_custom_call.1} parent=1 // pred_check_branch
      %420 = sbr.rel (0) target = $region77
    $region76: #{tpu_custom_call.1} parent=1 // pred_region
      %s422 = ssub.s32 128, 128
      %423 = vsyncadd [#allocation4], %s422
      %s425 = sshll.u32 [#allocation18], 4
      %s426 = int_to_ptr.vmem [resolvable:$true] %s425
      %428 = dma.vmem_to_hbm [thread:$0]  %s426, 128, %s9, [#allocation4]
    $region77: #{tpu_custom_call.1} parent=1 // pred_fallthru
      _
    // Predicated region
    $region78: #{tpu_custom_call.1} parent=1 // pred_check
      _
    $region79: #{tpu_custom_call.1} parent=1 // pred_check_branch
      %430 = sbr.rel (0) target = $region81
    $region80: #{tpu_custom_call.1} parent=1 // pred_region
      %431 = dma.done [#allocation4], 128
    $region81: #{tpu_custom_call.1} parent=1 // pred_fallthru
      _
    %432 = vsyncpa [#allocation3], 1
    %433 = vsyncpa [#allocation8], 1
    %434 = vsyncpa [#allocation11], 1
    %435 = vsyncpa [#allocation14], 1
    %436 = vsyncpa [#allocation17], 1
    %437 = vsyncpa [#allocation4], 1
    %438 = vsyncpa [#allocation5], 1

</llo_original>
